<compile_context>
chip_gen: v5e
topology: v5e:2x2
jax: 0.10.0
libtpu: 0.0.40
codegen_flags: <defaults>
</compile_context>

<pallas_src>
import functools

import jax
import jax.numpy as jnp
from jax.experimental import pallas as pl
from jax.experimental.pallas import tpu as pltpu


HIDDEN = 128            # fixed by the module definition (nn.Linear(latent_dim, 128))
LANE = 128              # TPU vreg lane width
SUBLANE = 8             # f32 sublane count
TB_MAX = 1024           # default max batch tile (review: 512 -> 1024)
PAD_MIN_OUT = 4 * LANE  # only lane-pad the output when output_dim >= 512
WEIGHT_SINGLE_BUFFER_BYTES = 2 * 1024 * 1024  # single-buffer weights past this


def _round_up(x, m):
    return ((x + m - 1) // m) * m


# ----------------------------------------------------------------------------
# Kernel: one batch tile of  out = relu(x @ w1 + b1) @ w2 + b2
# ----------------------------------------------------------------------------
def _decoder_kernel(x_ref, w1_ref, b1_ref, w2_ref, b2_ref, out_ref):
    # In-kernel cast of x to the weight dtype (bf16 path) — no extra HBM bytes.
    x = x_ref[...].astype(w1_ref.dtype)
    # fc1 + bias + ReLU  (MXU matmul, f32 accumulation; bias/ReLU in f32)
    h = jnp.dot(x, w1_ref[...], preferred_element_type=jnp.float32)
    h = jnp.maximum(h + b1_ref[...], 0.0)                 # (TB, 128) + (1, 128)
    # fc2 + bias — hidden cast to the fc2 weight dtype; accumulation stays f32.
    y = jnp.dot(h.astype(w2_ref.dtype), w2_ref[...],
                preferred_element_type=jnp.float32)
    out_ref[...] = (y + b2_ref[...]).astype(out_ref.dtype)


# ----------------------------------------------------------------------------
# One-time parameter preparation (hoisted out of the per-call path).
# ----------------------------------------------------------------------------
def prepare_decoder_params(w1, b1, w2, b2, compute_dtype=jnp.float32):
    """Cast weights once, keep biases f32, optionally lane-pad a wide fc2.

    Returns (w1, b1, w2, b2, output_dim) ready for decoder_forward.
    """
    latent_dim, hidden = w1.shape
    hidden2, output_dim = w2.shape
    assert hidden == HIDDEN and hidden2 == HIDDEN
    b1 = jnp.asarray(b1, jnp.float32).reshape(1, hidden)
    b2 = jnp.asarray(b2, jnp.float32).reshape(1, output_dim)
    # Conditional lane-padding: only when output_dim is large (pad ratio small).
    if output_dim >= PAD_MIN_OUT and output_dim % LANE != 0:
        n_pad = _round_up(output_dim, LANE)
        w2 = jnp.zeros((hidden, n_pad), w2.dtype).at[:, :output_dim].set(w2)
        b2 = jnp.zeros((1, n_pad), jnp.float32).at[:, :output_dim].set(b2)
    return (w1.astype(compute_dtype), b1, w2.astype(compute_dtype), b2,
            int(output_dim))


def _pick_tile(B, tb_max, align):
    """Batch tile: sublane-aligned, and >= 2 grid steps when B allows (v7x)."""
    tb_max = max(align, int(tb_max))
    if B <= 2 * align:
        return B                       # single block; block == full array is legal
    tb = min(tb_max, _round_up(pl.cdiv(B, 2), align))
    return min(tb, _round_up(B, align))


# ----------------------------------------------------------------------------
# Forward wrapper.
# ----------------------------------------------------------------------------
@functools.partial(jax.jit,
                   static_argnames=("out_dtype", "tb_max", "output_dim"))
def decoder_forward(x, w1, b1, w2, b2, *, out_dtype=jnp.float32,
                    tb_max=TB_MAX, output_dim=None):
    """x: (B, latent_dim); returns (B, output_dim) in out_dtype."""
    B, latent_dim = x.shape
    hidden, n_out = w2.shape
    assert w1.shape == (latent_dim, hidden) and hidden == HIDDEN
    if output_dim is None:
        output_dim = n_out
    b1 = jnp.asarray(b1, jnp.float32).reshape(1, hidden)
    b2 = jnp.asarray(b2, jnp.float32).reshape(1, n_out)

    out_itemsize = jnp.dtype(out_dtype).itemsize
    cdt_itemsize = jnp.dtype(w1.dtype).itemsize
    align = 16 if out_itemsize == 2 else SUBLANE

    # --- batch tiling --------------------------------------------------------
    tb = _pick_tile(B, tb_max, align)
    grid = (pl.cdiv(B, tb),)

    # --- resident-weight buffering & VMEM budget -----------------------------
    weight_bytes = (latent_dim * hidden + hidden * n_out) * cdt_itemsize
    single_buffer_weights = weight_bytes > WEIGHT_SINGLE_BUFFER_BYTES
    w_bufs = 1 if single_buffer_weights else 2
    buf_bytes = (2 * tb * latent_dim * x.dtype.itemsize       # x double-buffered
                 + 2 * tb * n_out * out_itemsize              # out double-buffered
                 + w_bufs * weight_bytes                       # resident weights
                 + 2 * (hidden + n_out) * 4)                   # biases (f32)
    vmem_limit = int(min(48 * 1024 * 1024, max(8 * 1024 * 1024, 2 * buf_bytes)))

    def _resident_spec(shape):
        if single_buffer_weights:
            return pl.BlockSpec(shape, lambda i: (0, 0),
                                pipeline_mode=pl.Buffered(1))
        return pl.BlockSpec(shape, lambda i: (0, 0))

    flops = 2 * B * (latent_dim * hidden + hidden * n_out)
    bytes_accessed = (x.size * x.dtype.itemsize
                      + weight_bytes
                      + (hidden + n_out) * 4
                      + B * n_out * out_itemsize)

    out = pl.pallas_call(
        _decoder_kernel,
        out_shape=jax.ShapeDtypeStruct((B, n_out), out_dtype),
        grid_spec=pltpu.PrefetchScalarGridSpec(
            num_scalar_prefetch=0,
            grid=grid,
            in_specs=[
                pl.BlockSpec((tb, latent_dim), lambda i: (i, 0)),   # x tile
                _resident_spec((latent_dim, hidden)),               # w1 (resident)
                _resident_spec((1, hidden)),                        # b1 (resident)
                _resident_spec((hidden, n_out)),                    # w2 (resident)
                _resident_spec((1, n_out)),                         # b2 (resident)
            ],
            out_specs=pl.BlockSpec((tb, n_out), lambda i: (i, 0)),
        ),
        compiler_params=pltpu.CompilerParams(
            dimension_semantics=("parallel",),        # shard batch across v7x TCs
            vmem_limit_bytes=vmem_limit,
        ),
        cost_estimate=pl.CostEstimate(
            flops=flops, transcendentals=0, bytes_accessed=bytes_accessed),
    )(x, w1, b1, w2, b2)

    # Only slice when fc2 was lane-padded (output_dim >= 512 and not a multiple
    # of 128); for small output_dim this is a no-op branch at trace time.
    if n_out != output_dim:
        out = out[:, :output_dim]
    return out


# ----------------------------------------------------------------------------
# Parameter init (mimics PyTorch nn.Linear default: uniform ±1/sqrt(fan_in)).
# ----------------------------------------------------------------------------
def init_decoder_params(key, latent_dim, output_dim):
    k1, k2, k3, k4 = jax.random.split(key, 4)
    lim1 = 1.0 / jnp.sqrt(jnp.float32(latent_dim))
    lim2 = 1.0 / jnp.sqrt(jnp.float32(HIDDEN))
    w1 = jax.random.uniform(k1, (latent_dim, HIDDEN), jnp.float32, -lim1, lim1)
    b1 = jax.random.uniform(k2, (1, HIDDEN), jnp.float32, -lim1, lim1)
    w2 = jax.random.uniform(k3, (HIDDEN, output_dim), jnp.float32, -lim2, lim2)
    b2 = jax.random.uniform(k4, (1, output_dim), jnp.float32, -lim2, lim2)
    return w1, b1, w2, b2


def _reference(x, w1, b1, w2, b2):
    return jnp.maximum(x @ w1 + b1, 0.0) @ w2 + b2


if __name__ == "__main__":
    latent_dim = 32
    output_dim = 16
    batch = 8

    key = jax.random.PRNGKey(0)
    kx, kp, kx2 = jax.random.split(key, 3)
    x = jax.random.normal(kx, (batch, latent_dim), jnp.float32)
    w1, b1, w2, b2 = init_decoder_params(kp, latent_dim, output_dim)
    ref = _reference(x, w1, b1, w2, b2)

    # 1) f32 compute path (default) — matches the PyTorch reference closely.
    pf32 = prepare_decoder_params(w1, b1, w2, b2, compute_dtype=jnp.float32)
    out_f32 = jax.block_until_ready(
        decoder_forward(x, *pf32[:4], output_dim=pf32[4]))
    assert out_f32.shape == (batch, output_dim)
    assert jnp.allclose(out_f32, ref, atol=1e-5, rtol=1e-5)

    # 2) bf16 weight / bf16 output path (byte-budget win on v5e/v6e/v7x);
    #    x stays f32 in HBM and is cast to bf16 inside the kernel.
    pbf16 = prepare_decoder_params(w1, b1, w2, b2, compute_dtype=jnp.bfloat16)
    out_bf16 = jax.block_until_ready(
        decoder_forward(x, *pbf16[:4], output_dim=pbf16[4],
                        out_dtype=jnp.bfloat16))
    assert out_bf16.shape == (batch, output_dim)
    assert jnp.allclose(out_bf16.astype(jnp.float32), ref, atol=5e-2, rtol=5e-2)

    # 3) Multi-tile grid path (partial final block) with a small tile size,
    #    exercising the pipelined batch tiling / >=2 grid steps.
    batch2 = 40
    x2 = jax.random.normal(kx2, (batch2, latent_dim), jnp.float32)
    out_tiled = jax.block_until_ready(
        decoder_forward(x2, *pf32[:4], output_dim=pf32[4], tb_max=16))
    assert out_tiled.shape == (batch2, output_dim)
    assert jnp.allclose(out_tiled, _reference(x2, w1, b1, w2, b2),
                        atol=1e-5, rtol=1e-5)

    print("KERNEL_OK")
</pallas_src>

<mosaic_0001>
module attributes {stable_mosaic.version = 11 : i64} {
  func.func @_decoder_kernel(%arg0: i32, %arg1: memref<8x32xf32, #tpu.memory_space<vmem>>, %arg2: memref<32x128xf32, #tpu.memory_space<vmem>>, %arg3: memref<1x128xf32, #tpu.memory_space<vmem>>, %arg4: memref<128x16xf32, #tpu.memory_space<vmem>>, %arg5: memref<1x16xf32, #tpu.memory_space<vmem>>, %arg6: memref<8x16xf32, #tpu.memory_space<vmem>>) attributes {dimension_semantics = [#tpu.dimension_semantics<parallel>], iteration_bounds = array<i64: 1>, scalar_prefetch = 0 : i64, scratch_operands = 0 : i64, tpu.core_type = #tpu.core_type<tc>, window_params = [{transform_indices = @transform_0, window_bounds = array<i64: 8, 32>}, {pipeline_mode = #tpu.pipeline_mode<synchronous>, transform_indices = @transform_1, window_bounds = array<i64: 32, 128>}, {pipeline_mode = #tpu.pipeline_mode<synchronous>, transform_indices = @transform_2, window_bounds = array<i64: 1, 128>}, {pipeline_mode = #tpu.pipeline_mode<synchronous>, transform_indices = @transform_3, window_bounds = array<i64: 128, 16>}, {pipeline_mode = #tpu.pipeline_mode<synchronous>, transform_indices = @transform_4, window_bounds = array<i64: 1, 16>}, {transform_indices = @transform_5, window_bounds = array<i64: 8, 16>}]} {
    %c0 = arith.constant 0 : index
    %c0_0 = arith.constant 0 : index
    %0 = vector.load %arg1[%c0, %c0_0] : memref<8x32xf32, #tpu.memory_space<vmem>>, vector<8x32xf32>
    %c0_1 = arith.constant 0 : index
    %c0_2 = arith.constant 0 : index
    %1 = vector.load %arg2[%c0_1, %c0_2] : memref<32x128xf32, #tpu.memory_space<vmem>>, vector<32x128xf32>
    %cst = arith.constant dense<0.000000e+00> : vector<8x128xf32>
    %2 = tpu.matmul %0, %1, %cst {dimension_numbers = #tpu.dot_dimension_numbers<[1], [0], [0], [1], [0, 0, 1, 1], [], []>} : vector<8x32xf32>, vector<32x128xf32>, vector<8x128xf32> -> vector<8x128xf32>
    %c0_3 = arith.constant 0 : index
    %c0_4 = arith.constant 0 : index
    %3 = vector.load %arg3[%c0_3, %c0_4] : memref<1x128xf32, #tpu.memory_space<vmem>>, vector<1x128xf32>
    %4 = vector.broadcast %3 : vector<1x128xf32> to vector<8x128xf32>
    %5 = arith.addf %2, %4 : vector<8x128xf32>
    %cst_5 = arith.constant 0.000000e+00 : f32
    %6 = vector.broadcast %cst_5 : f32 to vector<8x128xf32>
    %7 = arith.maximumf %5, %6 : vector<8x128xf32>
    %c0_6 = arith.constant 0 : index
    %c0_7 = arith.constant 0 : index
    %8 = vector.load %arg4[%c0_6, %c0_7] : memref<128x16xf32, #tpu.memory_space<vmem>>, vector<128x16xf32>
    %cst_8 = arith.constant dense<0.000000e+00> : vector<8x16xf32>
    %9 = tpu.matmul %7, %8, %cst_8 {dimension_numbers = #tpu.dot_dimension_numbers<[1], [0], [0], [1], [0, 0, 1, 1], [], []>} : vector<8x128xf32>, vector<128x16xf32>, vector<8x16xf32> -> vector<8x16xf32>
    %c0_9 = arith.constant 0 : index
    %c0_10 = arith.constant 0 : index
    %10 = vector.load %arg5[%c0_9, %c0_10] : memref<1x16xf32, #tpu.memory_space<vmem>>, vector<1x16xf32>
    %11 = vector.broadcast %10 : vector<1x16xf32> to vector<8x16xf32>
    %12 = arith.addf %9, %11 : vector<8x16xf32>
    %c0_11 = arith.constant 0 : index
    %c0_12 = arith.constant 0 : index
    %13 = vector.load %arg6[%c0_11, %c0_12] : memref<8x16xf32, #tpu.memory_space<vmem>>, vector<8x16xf32>
    tpu.vector_store %arg6[%c0_11, %c0_12], %12 {strides = array<i32>} : memref<8x16xf32, #tpu.memory_space<vmem>>, vector<8x16xf32>,
    return
  }
  func.func @transform_0(%arg0: i32) -> (i32, i32) {
    %c0_i32 = arith.constant 0 : i32
    %c0_i32_0 = arith.constant 0 : i32
    return %arg0, %c0_i32 : i32, i32
  }
  func.func @transform_1(%arg0: i32) -> (i32, i32) {
    %c0_i32 = arith.constant 0 : i32
    %c0_i32_0 = arith.constant 0 : i32
    %c0_i32_1 = arith.constant 0 : i32
    return %c0_i32, %c0_i32_0 : i32, i32
  }
  func.func @transform_2(%arg0: i32) -> (i32, i32) {
    %c0_i32 = arith.constant 0 : i32
    %c0_i32_0 = arith.constant 0 : i32
    %c0_i32_1 = arith.constant 0 : i32
    return %c0_i32, %c0_i32_0 : i32, i32
  }
  func.func @transform_3(%arg0: i32) -> (i32, i32) {
    %c0_i32 = arith.constant 0 : i32
    %c0_i32_0 = arith.constant 0 : i32
    %c0_i32_1 = arith.constant 0 : i32
    return %c0_i32, %c0_i32_0 : i32, i32
  }
  func.func @transform_4(%arg0: i32) -> (i32, i32) {
    %c0_i32 = arith.constant 0 : i32
    %c0_i32_0 = arith.constant 0 : i32
    %c0_i32_1 = arith.constant 0 : i32
    return %c0_i32, %c0_i32_0 : i32, i32
  }
  func.func @transform_5(%arg0: i32) -> (i32, i32) {
    %c0_i32 = arith.constant 0 : i32
    %c0_i32_0 = arith.constant 0 : i32
    return %arg0, %c0_i32 : i32, i32
  }
}

</mosaic_0001>

<llo_original>
// kernel: decoder_forward.1
$region0: #{decoder_forward.1}
  #allocation0 [shape = 'u32[]', space=smem, size = 0x4, offset = 0x4, fixed_abs, tag = 'smem constant byte address 0x4 - core index']
  #allocation1 [shape = 'u32[72,128]{1,0:T(1,128)}', space=vmem, size = 0x9000, scoped, tag = 'internal scratch']
  %s0 = inlined_call_operand.vmem [shape: f32[8,32], index: 0, kind: input, shape index: {}]
  %s1 = inlined_call_operand.vmem [shape: f32[32,128], index: 1, kind: input, shape index: {}]
  %s2 = inlined_call_operand.vmem [shape: f32[1,128], index: 2, kind: input, shape index: {}]
  %s3 = inlined_call_operand.vmem [shape: f32[128,16], index: 3, kind: input, shape index: {}]
  %s4 = inlined_call_operand.vmem [shape: f32[1,16], index: 4, kind: input, shape index: {}]
  %s5 = inlined_call_operand.hbm [shape: f32[8,16], index: 5, kind: output, shape index: {}]
  %s6 = sld [smem:[#allocation0]]
  $region30: #{decoder_forward.1} parent=0
    _
  %s8 = ssub.s32 1, %s6
  %s9 = scalar_select 0, %s8, %s6
  $region1: #{decoder_forward.1} parent=0
    #allocation2 [shape = 'u8[4096]{0}', space=vmem, size = 0x1000, scoped, tag = 'output window, operand 0, single buffered']
    #allocation3 [shape = 's32[1]{0}', space=sflag, size = 0x4, scoped, tag = 'scoped memory for decoder_forward.1']
    %10 = vsyncpa [#allocation3], 0
    // Predicated region
    $region2: #{decoder_forward.1} parent=1 // pred_check
      _
    $region3: #{decoder_forward.1} parent=1 // pred_check_branch
      %12 = sbr.rel (0) target = $region5
    $region4: #{decoder_forward.1} parent=1 // pred_region
      _
    $region5: #{decoder_forward.1} parent=1 // pred_fallthru
      _
    // Predicated region
    $region6: #{decoder_forward.1} parent=1 // pred_check
      _
    $region7: #{decoder_forward.1} parent=1 // pred_check_branch
      %14 = sbr.rel (0) target = $region9
    $region8: #{decoder_forward.1} parent=1 // pred_region
      _
    $region9: #{decoder_forward.1} parent=1 // pred_fallthru
      _
    // Predicated region
    $region10: #{decoder_forward.1} parent=1 // pred_check
      _
    $region11: #{decoder_forward.1} parent=1 // pred_check_branch
      %16 = sbr.rel (0) target = $region13
    $region12: #{decoder_forward.1} parent=1 // pred_region
      _
    $region13: #{decoder_forward.1} parent=1 // pred_fallthru
      _
    // Predicated region
    $region14: #{decoder_forward.1} parent=1 // pred_check
      _
    $region15: #{decoder_forward.1} parent=1 // pred_check_branch
      %18 = sbr.rel (0) target = $region17
    $region16: #{decoder_forward.1} parent=1 // pred_region
      _
    $region17: #{decoder_forward.1} parent=1 // pred_fallthru
      _
    // Predicated region
    $region18: #{decoder_forward.1} parent=1 // pred_check
      _
    $region19: #{decoder_forward.1} parent=1 // pred_check_branch
      %20 = sbr.rel (0) target = $region21
    $region20: #{decoder_forward.1} parent=1 // pred_region
      _
    $region21: #{decoder_forward.1} parent=1 // pred_fallthru
      _
    %v21 = vld [vmem:[%s0] sm:$0xff]
    %v22 = vld [vmem:[%s1] sm:$0xff]
    %v23 = vld [vmem:[%s1 + $0x8] sm:$0xff]
    %v24 = vld [vmem:[%s1 + $0x10] sm:$0xff]
    %v25 = vld [vmem:[%s1 + $0x18] sm:$0xff]
    %v26 = vld [vmem:[%s2] sm:$0x1]
    %v28 = vperm.slane %v26, 0
    %vm30 = vcmask 261120
    %v32 = vsel %vm30, %v21, 0
    %34 = vmatpush.msra.mxu0 0.0
    %35 = vmatpush.msra.mxu0 0.0
    %36 = vmatpush.msra.mxu0 0.0
    %37 = vmatpush.msra.mxu0 0.0
    %38 = vmatpush.msra.mxu0 0.0
    %39 = vmatpush.msra.mxu0 0.0
    %40 = vmatpush.msra.mxu0 0.0
    %41 = vmatpush.msra.mxu0 0.0
    %42 = vmatpush.msra.mxu0 0.0
    %43 = vmatpush.msra.mxu0 0.0
    %44 = vmatpush.msra.mxu0 0.0
    %45 = vmatpush.msra.mxu0 0.0
    %46 = vmatpush.msra.mxu0 %v25
    %47 = vmatpush.msra.mxu0 %v24
    %48 = vmatpush.msra.mxu0 %v23
    %49 = vmatpush.msra.mxu0 %v22
    %50 = vmatmul.f32.gmra.mxu0 %v32
    %v51 = vpop.f32.mrf.mxu0
    %v52 = vadd.f32 %v28, %v51
    %53 = vdwg.mxu0
    %v54 = vmax.f32 %v52, 0.0
    %v55 = vld [vmem:[%s3] sm:$0xff]
    %v56 = vld [vmem:[%s3 + $0x8] sm:$0xff]
    %v57 = vld [vmem:[%s3 + $0x10] sm:$0xff]
    %v58 = vld [vmem:[%s3 + $0x18] sm:$0xff]
    %v59 = vld [vmem:[%s3 + $0x20] sm:$0xff]
    %v60 = vld [vmem:[%s3 + $0x28] sm:$0xff]
    %v61 = vld [vmem:[%s3 + $0x30] sm:$0xff]
    %v62 = vld [vmem:[%s3 + $0x38] sm:$0xff]
    %v63 = vld [vmem:[%s3 + $0x40] sm:$0xff]
    %v64 = vld [vmem:[%s3 + $0x48] sm:$0xff]
    %v65 = vld [vmem:[%s3 + $0x50] sm:$0xff]
    %v66 = vld [vmem:[%s3 + $0x58] sm:$0xff]
    %v67 = vld [vmem:[%s3 + $0x60] sm:$0xff]
    %v68 = vld [vmem:[%s3 + $0x68] sm:$0xff]
    %v69 = vld [vmem:[%s3 + $0x70] sm:$0xff]
    %v70 = vld [vmem:[%s3 + $0x78] sm:$0xff]
    %v71 = vld [vmem:[%s4] sm:$0x1]
    %v73 = vperm.slane %v71, 0
    %75 = vmatpush.msra.mxu0 %v70
    %76 = vmatpush.msra.mxu0 %v69
    %77 = vmatpush.msra.mxu0 %v68
    %78 = vmatpush.msra.mxu0 %v67
    %79 = vmatpush.msra.mxu0 %v66
    %80 = vmatpush.msra.mxu0 %v65
    %81 = vmatpush.msra.mxu0 %v64
    %82 = vmatpush.msra.mxu0 %v63
    %83 = vmatpush.msra.mxu0 %v62
    %84 = vmatpush.msra.mxu0 %v61
    %85 = vmatpush.msra.mxu0 %v60
    %86 = vmatpush.msra.mxu0 %v59
    %87 = vmatpush.msra.mxu0 %v58
    %88 = vmatpush.msra.mxu0 %v57
    %89 = vmatpush.msra.mxu0 %v56
    %90 = vmatpush.msra.mxu0 %v55
    %91 = vmatmul.f32.gmra.mxu0 %v54
    %v92 = vpop.f32.mrf.mxu0
    %v93 = vadd.f32 %v73, %v92
    %94 = vdwg.mxu0
    %vm95 = vcmask 130048
    %96 = vst.msk [vmem:[#allocation2] sm:$0xff] %vm95, %v93
    // Predicated region
    $region22: #{decoder_forward.1} parent=1 // pred_check
      _
    $region23: #{decoder_forward.1} parent=1 // pred_check_branch
      %98 = sbr.rel (0) target = $region25
    $region24: #{decoder_forward.1} parent=1 // pred_region
      %100 = vsyncadd [#allocation3], 0
      %s102 = sshll.u32 [#allocation2], 4
      %s103 = int_to_ptr.vmem [resolvable:$true] %s102
      %s104 = sshll.u32 %s5, 4
      %s105 = int_to_ptr.hbm [resolvable:$true] %s104
      %107 = dma.vmem_to_hbm [thread:$0]  %s103, 128, %s105, [#allocation3]
    $region25: #{decoder_forward.1} parent=1 // pred_fallthru
      _
    // Predicated region
    $region26: #{decoder_forward.1} parent=1 // pred_check
      _
    $region27: #{decoder_forward.1} parent=1 // pred_check_branch
      %109 = sbr.rel (0) target = $region29
    $region28: #{decoder_forward.1} parent=1 // pred_region
      %111 = dma.done [#allocation3], 128
    $region29: #{decoder_forward.1} parent=1 // pred_fallthru
      _
    %112 = vsyncpa [#allocation3], 1

</llo_original>
